<compile_context>
chip_gen: v5e
topology: v5e:2x2
jax: 0.10.0
libtpu: 0.0.40
codegen_flags: <defaults>
</compile_context>

<pallas_src>
import jax
import jax.numpy as jnp
from jax import lax
from jax.experimental import pallas as pl
from jax.experimental.pallas import tpu as pltpu

NEG_SLOPE = 0.01  # PyTorch nn.LeakyReLU default


def _leaky_relu(x):
    # max(x, a*x) == LeakyReLU(x) for 0 < a < 1; 2 VALU ops (mul + max).
    return jnp.maximum(x, NEG_SLOPE * x)


def dqn_kernel(x_ref, w_in_ref, b_in_ref, w_hid_ref, b_hid_ref, w_out_ref, b_out_ref, o_ref):
    # Layouts:
    #   x_ref:     (tb, in_size)  bf16   (native batch-major layout, no wrapper transpose)
    #   w_in_ref:  (H, in_size)   bf16     b_in_ref:  (H, 1)    f32
    #   w_hid_ref: (5, H, H)      bf16     b_hid_ref: (5, H, 1) f32
    #   w_out_ref: (H, 1)         f32      b_out_ref: (1, 1)    f32 (SMEM scalar)
    #   o_ref:     (1, tb)        f32      (lane-dense output row; batch on lanes)

    # First linear layer (no activation): h = W1 @ x^T + b1, contracting x's minor dim
    # directly on the MXU -> (H, tb) with batch on the 128-lane axis.
    h = lax.dot_general(
        w_in_ref[...], x_ref[...],
        dimension_numbers=(((1,), (1,)), ((), ())),
        preferred_element_type=jnp.float32,
    ) + b_in_ref[...]                                           # (H, tb) f32

    # 5 x (Linear(H, H) + LeakyReLU).  Static Python loop -> fully unrolled.
    for i in range(5):
        h = _leaky_relu(
            jnp.dot(w_hid_ref[i], h.astype(jnp.bfloat16),
                    preferred_element_type=jnp.float32)
            + b_hid_ref[i])                                     # (H, tb) f32

    # Head Linear(H, 1): VPU multiply + sublane reduction (keeps the MXU free and emits
    # a lane-dense (1, tb) row directly).
    out_row = jnp.sum(h * w_out_ref[...], axis=0, keepdims=True) + b_out_ref[0, 0]
    o_ref[...] = out_row.astype(o_ref.dtype)


def _pick_tb(B):
    """Return (tile_batch, padded_batch).

    B < 256  -> single full-dim tile (no padding, no grid loop).
    B >= 256 -> lane-dense 128-multiple tiles, capped at 1024 rows, with an EVEN
                grid of >= 2 steps so both v7x TensorCores get balanced work
                (the extra step is negligible on single-TC v5e/v6e).
    """
    if B < 256:
        return B, B
    slabs = pl.cdiv(B, 128)                 # number of 128-row lane slabs
    n_tiles = max(2, pl.cdiv(slabs, 8))     # tb cap = 8 * 128 = 1024
    if n_tiles % 2:
        n_tiles += 1                        # even tile count -> balanced megacore split
    tb = 128 * pl.cdiv(slabs, n_tiles)
    return tb, tb * n_tiles


def dqn_forward(x, params, *, tb=None):
    """x: (B, in_size) float. params: dict (see init_params). Returns (B, 1) float32."""
    B, in_size = x.shape
    H = params["w_in"].shape[0]

    if tb is None:
        tb, padded_B = _pick_tb(B)
    else:
        assert tb == B or tb % 128 == 0, "explicit batch tile must equal B or be a 128-multiple"
        padded_B = tb * pl.cdiv(B, tb)

    # Cast to bf16 (halves x DMA bytes / VMEM) and zero-pad ragged batches; both fuse
    # into one cheap XLA op.  NOTE: callers that already hold bf16 x avoid the cast.
    x = x.astype(jnp.bfloat16)
    if padded_B != B:
        x = jnp.pad(x, ((0, padded_B - B), (0, 0)))

    grid = (padded_B // tb,)

    def resident(shape):
        # Whole tensor resident in VMEM; constant index_map across the grid, so
        # single-buffer it (no need to hold the weight stack twice).
        return pl.BlockSpec(shape, lambda i: (0,) * len(shape),
                            pipeline_mode=pl.Buffered(1))

    out_row = pl.pallas_call(
        dqn_kernel,
        out_shape=jax.ShapeDtypeStruct((1, padded_B), jnp.float32),
        grid=grid,
        in_specs=[
            pl.BlockSpec((tb, in_size), lambda i: (i, 0)),      # x: native layout, batch-tiled
            resident((H, in_size)),                             # w_in  (bf16)
            resident((H, 1)),                                   # b_in  (f32)
            resident((5, H, H)),                                # w_hid (bf16, stacked)
            resident((5, H, 1)),                                # b_hid (f32, stacked)
            resident((H, 1)),                                   # w_out (f32)
            pl.BlockSpec(memory_space=pltpu.MemorySpace.SMEM),  # b_out scalar in SMEM
        ],
        out_specs=pl.BlockSpec((1, tb), lambda i: (0, i)),      # lane-dense output row
        compiler_params=pltpu.CompilerParams(
            dimension_semantics=("parallel",),                  # shards batch tiles across v7x TCs
        ),
    )(x, params["w_in"], params["b_in"], params["w_hid"], params["b_hid"],
      params["w_out"], params["b_out"])

    return out_row[:, :B].reshape(B, 1)


def init_params(key, in_size, hidden):
    """Deterministic synthetic parameters (PyTorch-native (out, in) weight layout)."""
    keys = jax.random.split(key, 6)
    scale = 0.1
    return {
        "w_in":  (scale * jax.random.normal(keys[0], (hidden, in_size), jnp.float32)).astype(jnp.bfloat16),
        "b_in":  scale * jax.random.normal(keys[1], (hidden, 1), jnp.float32),
        "w_hid": (scale * jax.random.normal(keys[2], (5, hidden, hidden), jnp.float32)).astype(jnp.bfloat16),
        "b_hid": scale * jax.random.normal(keys[3], (5, hidden, 1), jnp.float32),
        "w_out": scale * jax.random.normal(keys[4], (hidden, 1), jnp.float32),
        "b_out": scale * jax.random.normal(keys[5], (1, 1), jnp.float32),
    }


def dqn_reference(x, params):
    """Pure-JAX reference (standard row-major orientation, same bf16/f32 numerics)."""
    h = (jnp.dot(x.astype(jnp.bfloat16), params["w_in"].T,
                 preferred_element_type=jnp.float32)
         + params["b_in"].reshape(1, -1))
    for i in range(5):
        h = _leaky_relu(
            jnp.dot(h.astype(jnp.bfloat16), params["w_hid"][i].T,
                    preferred_element_type=jnp.float32)
            + params["b_hid"][i].reshape(1, -1))
    return jnp.dot(h, params["w_out"], preferred_element_type=jnp.float32) + params["b_out"]


if __name__ == "__main__":
    key = jax.random.PRNGKey(0)
    kx, kp, kx2 = jax.random.split(key, 3)

    in_size, hidden = 16, 32
    params = init_params(kp, in_size, hidden)

    # Small case: single grid step (tb = B = 16), no padding.
    B = 16
    x = jax.random.normal(kx, (B, in_size), jnp.float32)
    out = jax.block_until_ready(dqn_forward(x, params))
    ref = dqn_reference(x, params)
    assert out.shape == (B, 1)
    assert jnp.allclose(out, ref, atol=1e-3, rtol=1e-3), "mismatch vs reference (B=16)"

    # Ragged larger batch: exercises zero-padding (300 -> 512), tb=256, even grid=(2,)
    # ("parallel" axis feeds both v7x TensorCores), and the output slice-back.
    B2 = 300
    x2 = jax.random.normal(kx2, (B2, in_size), jnp.float32)
    out2 = jax.block_until_ready(dqn_forward(x2, params))
    ref2 = dqn_reference(x2, params)
    assert out2.shape == (B2, 1)
    assert jnp.allclose(out2, ref2, atol=1e-3, rtol=1e-3), "mismatch vs reference (B=300)"

    print("KERNEL_OK")
</pallas_src>

<mosaic_0001>
module attributes {stable_mosaic.version = 11 : i64} {
  func.func @dqn_kernel(%arg0: i32, %arg1: memref<16x16xbf16, #tpu.memory_space<vmem>>, %arg2: memref<32x16xbf16, #tpu.memory_space<vmem>>, %arg3: memref<32x1xf32, #tpu.memory_space<vmem>>, %arg4: memref<5x32x32xbf16, #tpu.memory_space<vmem>>, %arg5: memref<5x32x1xf32, #tpu.memory_space<vmem>>, %arg6: memref<32x1xf32, #tpu.memory_space<vmem>>, %arg7: memref<1x1xf32, #tpu.memory_space<smem>>, %arg8: memref<1x16xf32, #tpu.memory_space<vmem>>) attributes {dimension_semantics = [#tpu.dimension_semantics<parallel>], iteration_bounds = array<i64: 1>, scalar_prefetch = 0 : i64, scratch_operands = 0 : i64, tpu.core_type = #tpu.core_type<tc>, window_params = [{transform_indices = @transform_0, window_bounds = array<i64: 16, 16>}, {pipeline_mode = #tpu.pipeline_mode<synchronous>, transform_indices = @transform_1, window_bounds = array<i64: 32, 16>}, {pipeline_mode = #tpu.pipeline_mode<synchronous>, transform_indices = @transform_2, window_bounds = array<i64: 32, 1>}, {pipeline_mode = #tpu.pipeline_mode<synchronous>, transform_indices = @transform_3, window_bounds = array<i64: 5, 32, 32>}, {pipeline_mode = #tpu.pipeline_mode<synchronous>, transform_indices = @transform_4, window_bounds = array<i64: 5, 32, 1>}, {pipeline_mode = #tpu.pipeline_mode<synchronous>, transform_indices = @transform_5, window_bounds = array<i64: 32, 1>}, {transform_indices = @transform_6, window_bounds = array<i64: 1, 1>}, {transform_indices = @transform_7, window_bounds = array<i64: 1, 16>}]} {
    %c0 = arith.constant 0 : index
    %c0_0 = arith.constant 0 : index
    %0 = vector.load %arg2[%c0, %c0_0] : memref<32x16xbf16, #tpu.memory_space<vmem>>, vector<32x16xbf16>
    %c0_1 = arith.constant 0 : index
    %c0_2 = arith.constant 0 : index
    %1 = vector.load %arg1[%c0_1, %c0_2] : memref<16x16xbf16, #tpu.memory_space<vmem>>, vector<16x16xbf16>
    %cst = arith.constant dense<0.000000e+00> : vector<32x16xf32>
    %2 = tpu.matmul %0, %1, %cst {dimension_numbers = #tpu.dot_dimension_numbers<[1], [1], [0], [0], [0, 0, 1, 0], [], []>} : vector<32x16xbf16>, vector<16x16xbf16>, vector<32x16xf32> -> vector<32x16xf32>
    %c0_3 = arith.constant 0 : index
    %c0_4 = arith.constant 0 : index
    %3 = vector.load %arg3[%c0_3, %c0_4] : memref<32x1xf32, #tpu.memory_space<vmem>>, vector<32x1xf32>
    %4 = vector.broadcast %3 : vector<32x1xf32> to vector<32x16xf32>
    %5 = arith.addf %2, %4 : vector<32x16xf32>
    %c0_5 = arith.constant 0 : index
    %c0_6 = arith.constant 0 : index
    %c0_7 = arith.constant 0 : index
    %6 = vector.load %arg4[%c0_5, %c0_6, %c0_7] : memref<5x32x32xbf16, #tpu.memory_space<vmem>>, vector<1x32x32xbf16>
    %7 = vector.shape_cast %6 : vector<1x32x32xbf16> to vector<32x32xbf16>
    %8 = arith.truncf %5 : vector<32x16xf32> to vector<32x16xbf16>
    %cst_8 = arith.constant dense<0.000000e+00> : vector<32x16xf32>
    %9 = tpu.matmul %7, %8, %cst_8 {dimension_numbers = #tpu.dot_dimension_numbers<[1], [0], [0], [1], [0, 0, 1, 1], [], []>} : vector<32x32xbf16>, vector<32x16xbf16>, vector<32x16xf32> -> vector<32x16xf32>
    %c0_9 = arith.constant 0 : index
    %c0_10 = arith.constant 0 : index
    %c0_11 = arith.constant 0 : index
    %10 = vector.load %arg5[%c0_9, %c0_10, %c0_11] : memref<5x32x1xf32, #tpu.memory_space<vmem>>, vector<1x32x1xf32>
    %11 = vector.shape_cast %10 : vector<1x32x1xf32> to vector<32x1xf32>
    %12 = vector.broadcast %11 : vector<32x1xf32> to vector<32x16xf32>
    %13 = arith.addf %9, %12 : vector<32x16xf32>
    %cst_12 = arith.constant 0.00999999977 : f32
    %14 = vector.broadcast %cst_12 : f32 to vector<32x16xf32>
    %15 = arith.mulf %14, %13 : vector<32x16xf32>
    %16 = arith.maximumf %13, %15 : vector<32x16xf32>
    %c1 = arith.constant 1 : index
    %c0_13 = arith.constant 0 : index
    %c0_14 = arith.constant 0 : index
    %17 = vector.load %arg4[%c1, %c0_13, %c0_14] : memref<5x32x32xbf16, #tpu.memory_space<vmem>>, vector<1x32x32xbf16>
    %18 = vector.shape_cast %17 : vector<1x32x32xbf16> to vector<32x32xbf16>
    %19 = arith.truncf %16 : vector<32x16xf32> to vector<32x16xbf16>
    %cst_15 = arith.constant dense<0.000000e+00> : vector<32x16xf32>
    %20 = tpu.matmul %18, %19, %cst_15 {dimension_numbers = #tpu.dot_dimension_numbers<[1], [0], [0], [1], [0, 0, 1, 1], [], []>} : vector<32x32xbf16>, vector<32x16xbf16>, vector<32x16xf32> -> vector<32x16xf32>
    %c1_16 = arith.constant 1 : index
    %c0_17 = arith.constant 0 : index
    %c0_18 = arith.constant 0 : index
    %21 = vector.load %arg5[%c1_16, %c0_17, %c0_18] : memref<5x32x1xf32, #tpu.memory_space<vmem>>, vector<1x32x1xf32>
    %22 = vector.shape_cast %21 : vector<1x32x1xf32> to vector<32x1xf32>
    %23 = vector.broadcast %22 : vector<32x1xf32> to vector<32x16xf32>
    %24 = arith.addf %20, %23 : vector<32x16xf32>
    %cst_19 = arith.constant 0.00999999977 : f32
    %25 = vector.broadcast %cst_19 : f32 to vector<32x16xf32>
    %26 = arith.mulf %25, %24 : vector<32x16xf32>
    %27 = arith.maximumf %24, %26 : vector<32x16xf32>
    %c2 = arith.constant 2 : index
    %c0_20 = arith.constant 0 : index
    %c0_21 = arith.constant 0 : index
    %28 = vector.load %arg4[%c2, %c0_20, %c0_21] : memref<5x32x32xbf16, #tpu.memory_space<vmem>>, vector<1x32x32xbf16>
    %29 = vector.shape_cast %28 : vector<1x32x32xbf16> to vector<32x32xbf16>
    %30 = arith.truncf %27 : vector<32x16xf32> to vector<32x16xbf16>
    %cst_22 = arith.constant dense<0.000000e+00> : vector<32x16xf32>
    %31 = tpu.matmul %29, %30, %cst_22 {dimension_numbers = #tpu.dot_dimension_numbers<[1], [0], [0], [1], [0, 0, 1, 1], [], []>} : vector<32x32xbf16>, vector<32x16xbf16>, vector<32x16xf32> -> vector<32x16xf32>
    %c2_23 = arith.constant 2 : index
    %c0_24 = arith.constant 0 : index
    %c0_25 = arith.constant 0 : index
    %32 = vector.load %arg5[%c2_23, %c0_24, %c0_25] : memref<5x32x1xf32, #tpu.memory_space<vmem>>, vector<1x32x1xf32>
    %33 = vector.shape_cast %32 : vector<1x32x1xf32> to vector<32x1xf32>
    %34 = vector.broadcast %33 : vector<32x1xf32> to vector<32x16xf32>
    %35 = arith.addf %31, %34 : vector<32x16xf32>
    %cst_26 = arith.constant 0.00999999977 : f32
    %36 = vector.broadcast %cst_26 : f32 to vector<32x16xf32>
    %37 = arith.mulf %36, %35 : vector<32x16xf32>
    %38 = arith.maximumf %35, %37 : vector<32x16xf32>
    %c3 = arith.constant 3 : index
    %c0_27 = arith.constant 0 : index
    %c0_28 = arith.constant 0 : index
    %39 = vector.load %arg4[%c3, %c0_27, %c0_28] : memref<5x32x32xbf16, #tpu.memory_space<vmem>>, vector<1x32x32xbf16>
    %40 = vector.shape_cast %39 : vector<1x32x32xbf16> to vector<32x32xbf16>
    %41 = arith.truncf %38 : vector<32x16xf32> to vector<32x16xbf16>
    %cst_29 = arith.constant dense<0.000000e+00> : vector<32x16xf32>
    %42 = tpu.matmul %40, %41, %cst_29 {dimension_numbers = #tpu.dot_dimension_numbers<[1], [0], [0], [1], [0, 0, 1, 1], [], []>} : vector<32x32xbf16>, vector<32x16xbf16>, vector<32x16xf32> -> vector<32x16xf32>
    %c3_30 = arith.constant 3 : index
    %c0_31 = arith.constant 0 : index
    %c0_32 = arith.constant 0 : index
    %43 = vector.load %arg5[%c3_30, %c0_31, %c0_32] : memref<5x32x1xf32, #tpu.memory_space<vmem>>, vector<1x32x1xf32>
    %44 = vector.shape_cast %43 : vector<1x32x1xf32> to vector<32x1xf32>
    %45 = vector.broadcast %44 : vector<32x1xf32> to vector<32x16xf32>
    %46 = arith.addf %42, %45 : vector<32x16xf32>
    %cst_33 = arith.constant 0.00999999977 : f32
    %47 = vector.broadcast %cst_33 : f32 to vector<32x16xf32>
    %48 = arith.mulf %47, %46 : vector<32x16xf32>
    %49 = arith.maximumf %46, %48 : vector<32x16xf32>
    %c4 = arith.constant 4 : index
    %c0_34 = arith.constant 0 : index
    %c0_35 = arith.constant 0 : index
    %50 = vector.load %arg4[%c4, %c0_34, %c0_35] : memref<5x32x32xbf16, #tpu.memory_space<vmem>>, vector<1x32x32xbf16>
    %51 = vector.shape_cast %50 : vector<1x32x32xbf16> to vector<32x32xbf16>
    %52 = arith.truncf %49 : vector<32x16xf32> to vector<32x16xbf16>
    %cst_36 = arith.constant dense<0.000000e+00> : vector<32x16xf32>
    %53 = tpu.matmul %51, %52, %cst_36 {dimension_numbers = #tpu.dot_dimension_numbers<[1], [0], [0], [1], [0, 0, 1, 1], [], []>} : vector<32x32xbf16>, vector<32x16xbf16>, vector<32x16xf32> -> vector<32x16xf32>
    %c4_37 = arith.constant 4 : index
    %c0_38 = arith.constant 0 : index
    %c0_39 = arith.constant 0 : index
    %54 = vector.load %arg5[%c4_37, %c0_38, %c0_39] : memref<5x32x1xf32, #tpu.memory_space<vmem>>, vector<1x32x1xf32>
    %55 = vector.shape_cast %54 : vector<1x32x1xf32> to vector<32x1xf32>
    %56 = vector.broadcast %55 : vector<32x1xf32> to vector<32x16xf32>
    %57 = arith.addf %53, %56 : vector<32x16xf32>
    %cst_40 = arith.constant 0.00999999977 : f32
    %58 = vector.broadcast %cst_40 : f32 to vector<32x16xf32>
    %59 = arith.mulf %58, %57 : vector<32x16xf32>
    %60 = arith.maximumf %57, %59 : vector<32x16xf32>
    %c0_41 = arith.constant 0 : index
    %c0_42 = arith.constant 0 : index
    %61 = vector.load %arg6[%c0_41, %c0_42] : memref<32x1xf32, #tpu.memory_space<vmem>>, vector<32x1xf32>
    %62 = vector.broadcast %61 : vector<32x1xf32> to vector<32x16xf32>
    %63 = arith.mulf %60, %62 : vector<32x16xf32>
    %cst_43 = arith.constant dense<0.000000e+00> : vector<16xf32>
    %64 = vector.multi_reduction <add>, %63, %cst_43 [0] : vector<32x16xf32> to vector<16xf32>
    %65 = vector.shape_cast %64 : vector<16xf32> to vector<1x16xf32>
    %c0_44 = arith.constant 0 : index
    %c0_45 = arith.constant 0 : index
    %66 = memref.load %arg7[%c0_44, %c0_45] : memref<1x1xf32, #tpu.memory_space<smem>>
    %67 = vector.broadcast %66 : f32 to vector<1x16xf32>
    %68 = arith.addf %65, %67 : vector<1x16xf32>
    %c0_46 = arith.constant 0 : index
    %c0_47 = arith.constant 0 : index
    %69 = vector.load %arg8[%c0_46, %c0_47] : memref<1x16xf32, #tpu.memory_space<vmem>>, vector<1x16xf32>
    tpu.vector_store %arg8[%c0_46, %c0_47], %68 {strides = array<i32>} : memref<1x16xf32, #tpu.memory_space<vmem>>, vector<1x16xf32>,
    return
  }
  func.func @transform_0(%arg0: i32) -> (i32, i32) {
    %c0_i32 = arith.constant 0 : i32
    %c0_i32_0 = arith.constant 0 : i32
    return %arg0, %c0_i32 : i32, i32
  }
  func.func @transform_1(%arg0: i32) -> (i32, i32) {
    %c0_i32 = arith.constant 0 : i32
    %c0_i32_0 = arith.constant 0 : i32
    %c0_i32_1 = arith.constant 0 : i32
    return %c0_i32, %c0_i32_0 : i32, i32
  }
  func.func @transform_2(%arg0: i32) -> (i32, i32) {
    %c0_i32 = arith.constant 0 : i32
    %c0_i32_0 = arith.constant 0 : i32
    %c0_i32_1 = arith.constant 0 : i32
    return %c0_i32, %c0_i32_0 : i32, i32
  }
  func.func @transform_3(%arg0: i32) -> (i32, i32, i32) {
    %c0_i32 = arith.constant 0 : i32
    %c0_i32_0 = arith.constant 0 : i32
    %c0_i32_1 = arith.constant 0 : i32
    %c0_i32_2 = arith.constant 0 : i32
    return %c0_i32, %c0_i32_0, %c0_i32_1 : i32, i32, i32
  }
  func.func @transform_4(%arg0: i32) -> (i32, i32, i32) {
    %c0_i32 = arith.constant 0 : i32
    %c0_i32_0 = arith.constant 0 : i32
    %c0_i32_1 = arith.constant 0 : i32
    %c0_i32_2 = arith.constant 0 : i32
    return %c0_i32, %c0_i32_0, %c0_i32_1 : i32, i32, i32
  }
  func.func @transform_5(%arg0: i32) -> (i32, i32) {
    %c0_i32 = arith.constant 0 : i32
    %c0_i32_0 = arith.constant 0 : i32
    %c0_i32_1 = arith.constant 0 : i32
    return %c0_i32, %c0_i32_0 : i32, i32
  }
  func.func @transform_6(%arg0: i32) -> (i32, i32) {
    %c0_i32 = arith.constant 0 : i32
    %c0_i32_0 = arith.constant 0 : i32
    %c0_i32_1 = arith.constant 0 : i32
    return %c0_i32, %c0_i32_0 : i32, i32
  }
  func.func @transform_7(%arg0: i32) -> (i32, i32) {
    %c0_i32 = arith.constant 0 : i32
    %c0_i32_0 = arith.constant 0 : i32
    return %c0_i32, %arg0 : i32, i32
  }
}

</mosaic_0001>

<llo_original>
// kernel: tpu_custom_call.1
$region0: #{tpu_custom_call.1}
  #allocation0 [shape = 'u32[]', space=smem, size = 0x4, offset = 0x4, fixed_abs, tag = 'smem constant byte address 0x4 - core index']
  #allocation1 [shape = 'u32[72,128]{1,0:T(1,128)}', space=vmem, size = 0x9000, scoped, tag = 'internal scratch']
  #allocation2 [shape = 'f32[1,1]{1,0:T(1,128)S(6)}', space=smem, size = 0x200, scoped, tag = 'scoped memory for tpu_custom_call.1']
  %s0 = inlined_call_operand.vmem [shape: bf16[16,16], index: 0, kind: input, shape index: {}]
  %s1 = inlined_call_operand.vmem [shape: bf16[32,16], index: 1, kind: input, shape index: {}]
  %s2 = inlined_call_operand.vmem [shape: f32[32,1], index: 2, kind: input, shape index: {}]
  %s3 = inlined_call_operand.vmem [shape: bf16[5,32,32], index: 3, kind: input, shape index: {}]
  %s4 = inlined_call_operand.vmem [shape: f32[5,32,1], index: 4, kind: input, shape index: {}]
  %s5 = inlined_call_operand.vmem [shape: f32[32,1], index: 5, kind: input, shape index: {}]
  %s6 = inlined_call_operand.<no memory space> [shape: f32[1,1], index: 6, kind: input, shape index: {}]
  %s7 = inlined_call_operand.hbm [shape: f32[1,16], index: 7, kind: output, shape index: {}]
  %s8 = sld [smem:[#allocation0]]
  $region38: #{tpu_custom_call.1} parent=0
    _
  %s10 = ssub.s32 1, %s8
  %s11 = scalar_select 0, %s10, %s8
  %12 = sst [smem:[#allocation2]] %s6
  $region1: #{tpu_custom_call.1} parent=0
    #allocation3 [shape = 'u8[512]{0}', space=vmem, size = 0x400, scoped, tag = 'output window, operand 0, single buffered']
    #allocation4 [shape = 's32[1]{0}', space=sflag, size = 0x4, scoped, tag = 'scoped memory for tpu_custom_call.1']
    %13 = vsyncpa [#allocation4], 0
    // Predicated region
    $region2: #{tpu_custom_call.1} parent=1 // pred_check
      _
    $region3: #{tpu_custom_call.1} parent=1 // pred_check_branch
      %15 = sbr.rel (0) target = $region5
    $region4: #{tpu_custom_call.1} parent=1 // pred_region
      _
    $region5: #{tpu_custom_call.1} parent=1 // pred_fallthru
      _
    // Predicated region
    $region6: #{tpu_custom_call.1} parent=1 // pred_check
      _
    $region7: #{tpu_custom_call.1} parent=1 // pred_check_branch
      %17 = sbr.rel (0) target = $region9
    $region8: #{tpu_custom_call.1} parent=1 // pred_region
      _
    $region9: #{tpu_custom_call.1} parent=1 // pred_fallthru
      _
    // Predicated region
    $region10: #{tpu_custom_call.1} parent=1 // pred_check
      _
    $region11: #{tpu_custom_call.1} parent=1 // pred_check_branch
      %19 = sbr.rel (0) target = $region13
    $region12: #{tpu_custom_call.1} parent=1 // pred_region
      _
    $region13: #{tpu_custom_call.1} parent=1 // pred_fallthru
      _
    // Predicated region
    $region14: #{tpu_custom_call.1} parent=1 // pred_check
      _
    $region15: #{tpu_custom_call.1} parent=1 // pred_check_branch
      %21 = sbr.rel (0) target = $region17
    $region16: #{tpu_custom_call.1} parent=1 // pred_region
      _
    $region17: #{tpu_custom_call.1} parent=1 // pred_fallthru
      _
    // Predicated region
    $region18: #{tpu_custom_call.1} parent=1 // pred_check
      _
    $region19: #{tpu_custom_call.1} parent=1 // pred_check_branch
      %23 = sbr.rel (0) target = $region21
    $region20: #{tpu_custom_call.1} parent=1 // pred_region
      _
    $region21: #{tpu_custom_call.1} parent=1 // pred_fallthru
      _
    // Predicated region
    $region22: #{tpu_custom_call.1} parent=1 // pred_check
      _
    $region23: #{tpu_custom_call.1} parent=1 // pred_check_branch
      %25 = sbr.rel (0) target = $region25
    $region24: #{tpu_custom_call.1} parent=1 // pred_region
      _
    $region25: #{tpu_custom_call.1} parent=1 // pred_fallthru
      _
    // Predicated region
    $region26: #{tpu_custom_call.1} parent=1 // pred_check
      _
    $region27: #{tpu_custom_call.1} parent=1 // pred_check_branch
      %27 = sbr.rel (0) target = $region29
    $region28: #{tpu_custom_call.1} parent=1 // pred_region
      _
    $region29: #{tpu_custom_call.1} parent=1 // pred_fallthru
      _
    %v29 = vld [vmem:[%s1] sm:$0xf]
    %v30 = vld [vmem:[%s1 + $0x4] sm:$0xf]
    %v31 = vld [vmem:[%s1 + $0x8] sm:$0xf]
    %v32 = vld [vmem:[%s1 + $0xc] sm:$0xf]
    %v33 = vld [vmem:[%s0] sm:$0xf]
    %v34 = vld [vmem:[%s0 + $0x4] sm:$0xf]
    %v35 = vld [vmem:[%s2] sm:$0xff]
    %v36 = vld [vmem:[%s2 + $0x8] sm:$0xff]
    %v37 = vld [vmem:[%s2 + $0x10] sm:$0xff]
    %v38 = vld [vmem:[%s2 + $0x18] sm:$0xff]
    %40 = vset.pattern.permute.xlu0 0
    %41 = vperm.xlu0 %40, %v35
    %v42 = vpop.permute.xlu0 %41
    %45 = vset.pattern.permute.xlu0 0
    %46 = vperm.xlu0 %45, %v36
    %v47 = vpop.permute.xlu0 %46
    %50 = vset.pattern.permute.xlu0 0
    %51 = vperm.xlu0 %50, %v37
    %v52 = vpop.permute.xlu0 %51
    %55 = vset.pattern.permute.xlu0 0
    %56 = vperm.xlu0 %55, %v38
    %v57 = vpop.permute.xlu0 %56
    %v63 = vunpack.c.l.b16 %v29
    %v64 = vunpack.c.l.b16 %v30
    %v65 = vunpack.c.l.b16 %v31
    %v66 = vunpack.c.l.b16 %v32
    %v67 = vpack.c.b16 %v64, %v63
    %v68 = vpack.c.b16 %v66, %v65
    %v71 = vunpack.c.l.b16 %v33
    %v72 = vunpack.c.l.b16 %v34
    %v73 = vpack.c.b16 %v72, %v71
    %vm74 = vcmask 130048
    %v76 = vsel %vm74, %v67, 0
    %v79 = vsel %vm74, %v68, 0
    %v82 = vsel %vm74, %v73, 0
    %84 = vmatpush.bf16.xpose.msra.mxu0 0
    %85 = vmatpush.bf16.xpose.msra.mxu0 0
    %86 = vmatpush.bf16.xpose.msra.mxu0 0
    %87 = vmatpush.bf16.xpose.msra.mxu0 0
    %88 = vmatpush.bf16.xpose.msra.mxu0 0
    %89 = vmatpush.bf16.xpose.msra.mxu0 0
    %90 = vmatpush.bf16.xpose.msra.mxu0 0
    %91 = vmatpush.bf16.xpose.msra.mxu0 %v82
    %92 = vmatmul.bf16.gmra.mxu0 %v76
    %v93 = vpop.f32.mrf.mxu0
    %v94 = vadd.f32 %v42, %v93
    %v95 = vpop.f32.mrf.mxu0
    %v96 = vadd.f32 %v47, %v95
    %97 = vmatmul.bf16.gmra.mxu0 %v79
    %v98 = vpop.f32.mrf.mxu0
    %v99 = vadd.f32 %v52, %v98
    %v100 = vpop.f32.mrf.mxu0
    %v101 = vadd.f32 %v57, %v100
    %102 = vdwg.mxu0
    %v103 = vld [vmem:[%s3] sm:$0xf]
    %v104 = vld [vmem:[%s3 + $0x4] sm:$0xf]
    %v105 = vld [vmem:[%s3 + $0x8] sm:$0xf]
    %v106 = vld [vmem:[%s3 + $0xc] sm:$0xf]
    %v107 = vpack.c.bf16 %v96, %v94
    %v108 = vpack.c.bf16 %v101, %v99
    %v109 = vld [vmem:[%s4] sm:$0xff]
    %v110 = vld [vmem:[%s4 + $0x8] sm:$0xff]
    %v111 = vld [vmem:[%s4 + $0x10] sm:$0xff]
    %v112 = vld [vmem:[%s4 + $0x18] sm:$0xff]
    %114 = vset.pattern.permute.xlu0 0
    %115 = vperm.xlu0 %114, %v109
    %v116 = vpop.permute.xlu0 %115
    %119 = vset.pattern.permute.xlu0 0
    %120 = vperm.xlu0 %119, %v110
    %v121 = vpop.permute.xlu0 %120
    %124 = vset.pattern.permute.xlu0 0
    %125 = vperm.xlu0 %124, %v111
    %v126 = vpop.permute.xlu0 %125
    %129 = vset.pattern.permute.xlu0 0
    %130 = vperm.xlu0 %129, %v112
    %v131 = vpop.permute.xlu0 %130
    %v137 = vunpack.c.l.b16 %v103
    %v138 = vunpack.c.l.b16 %v104
    %v139 = vunpack.c.l.b16 %v105
    %v140 = vunpack.c.l.b16 %v106
    %v141 = vpack.c.b16 %v138, %v137
    %v142 = vpack.c.b16 %v140, %v139
    %vm143 = vcmask 261120
    %v145 = vsel %vm143, %v141, 0
    %v148 = vsel %vm143, %v142, 0
    %150 = vmatpush.bf16.msra.mxu0 0
    %151 = vmatpush.bf16.msra.mxu0 0
    %152 = vmatpush.bf16.msra.mxu0 0
    %153 = vmatpush.bf16.msra.mxu0 0
    %154 = vmatpush.bf16.msra.mxu0 0
    %155 = vmatpush.bf16.msra.mxu0 0
    %156 = vmatpush.bf16.msra.mxu0 %v108
    %157 = vmatpush.bf16.msra.mxu0 %v107
    %158 = vmatmul.bf16.gmra.mxu0 %v145
    %v159 = vpop.f32.mrf.mxu0
    %v160 = vadd.f32 %v116, %v159
    %v161 = vpop.f32.mrf.mxu0
    %v162 = vadd.f32 %v121, %v161
    %163 = vmatmul.bf16.gmra.mxu0 %v148
    %v164 = vpop.f32.mrf.mxu0
    %v165 = vadd.f32 %v126, %v164
    %v166 = vpop.f32.mrf.mxu0
    %v167 = vadd.f32 %v131, %v166
    %168 = vdwg.mxu0
    %v169 = vmul.f32 %v160, 0.01
    %v170 = vmul.f32 %v162, 0.01
    %v171 = vmul.f32 %v165, 0.01
    %v172 = vmul.f32 %v167, 0.01
    %v173 = vmax.f32 %v160, %v169
    %v174 = vmax.f32 %v162, %v170
    %v175 = vmax.f32 %v165, %v171
    %v176 = vmax.f32 %v167, %v172
    %s177 = scalar_lea.vmem %s3, 16
    %v178 = vld [vmem:[%s177] sm:$0xf]
    %v179 = vld [vmem:[%s177 + $0x4] sm:$0xf]
    %v180 = vld [vmem:[%s177 + $0x8] sm:$0xf]
    %v181 = vld [vmem:[%s177 + $0xc] sm:$0xf]
    %v182 = vpack.c.bf16 %v174, %v173
    %v183 = vpack.c.bf16 %v176, %v175
    %s184 = scalar_lea.vmem %s4, 32
    %v185 = vld [vmem:[%s184] sm:$0xff]
    %v186 = vld [vmem:[%s184 + $0x8] sm:$0xff]
    %v187 = vld [vmem:[%s184 + $0x10] sm:$0xff]
    %v188 = vld [vmem:[%s184 + $0x18] sm:$0xff]
    %190 = vset.pattern.permute.xlu0 0
    %191 = vperm.xlu0 %190, %v185
    %v192 = vpop.permute.xlu0 %191
    %195 = vset.pattern.permute.xlu0 0
    %196 = vperm.xlu0 %195, %v186
    %v197 = vpop.permute.xlu0 %196
    %200 = vset.pattern.permute.xlu0 0
    %201 = vperm.xlu0 %200, %v187
    %v202 = vpop.permute.xlu0 %201
    %205 = vset.pattern.permute.xlu0 0
    %206 = vperm.xlu0 %205, %v188
    %v207 = vpop.permute.xlu0 %206
    %v213 = vunpack.c.l.b16 %v178
    %v214 = vunpack.c.l.b16 %v179
    %v215 = vunpack.c.l.b16 %v180
    %v216 = vunpack.c.l.b16 %v181
    %v217 = vpack.c.b16 %v214, %v213
    %v218 = vpack.c.b16 %v216, %v215
    %v220 = vsel %vm143, %v217, 0
    %v223 = vsel %vm143, %v218, 0
    %225 = vmatpush.bf16.msra.mxu0 0
    %226 = vmatpush.bf16.msra.mxu0 0
    %227 = vmatpush.bf16.msra.mxu0 0
    %228 = vmatpush.bf16.msra.mxu0 0
    %229 = vmatpush.bf16.msra.mxu0 0
    %230 = vmatpush.bf16.msra.mxu0 0
    %231 = vmatpush.bf16.msra.mxu0 %v183
    %232 = vmatpush.bf16.msra.mxu0 %v182
    %233 = vmatmul.bf16.gmra.mxu0 %v220
    %v234 = vpop.f32.mrf.mxu0
    %v235 = vadd.f32 %v192, %v234
    %v236 = vpop.f32.mrf.mxu0
    %v237 = vadd.f32 %v197, %v236
    %238 = vmatmul.bf16.gmra.mxu0 %v223
    %v239 = vpop.f32.mrf.mxu0
    %v240 = vadd.f32 %v202, %v239
    %v241 = vpop.f32.mrf.mxu0
    %v242 = vadd.f32 %v207, %v241
    %243 = vdwg.mxu0
    %v244 = vmul.f32 %v235, 0.01
    %v245 = vmul.f32 %v237, 0.01
    %v246 = vmul.f32 %v240, 0.01
    %v247 = vmul.f32 %v242, 0.01
    %v248 = vmax.f32 %v235, %v244
    %v249 = vmax.f32 %v237, %v245
    %v250 = vmax.f32 %v240, %v246
    %v251 = vmax.f32 %v242, %v247
    %s252 = scalar_lea.vmem %s3, 32
    %v253 = vld [vmem:[%s252] sm:$0xf]
    %v254 = vld [vmem:[%s252 + $0x4] sm:$0xf]
    %v255 = vld [vmem:[%s252 + $0x8] sm:$0xf]
    %v256 = vld [vmem:[%s252 + $0xc] sm:$0xf]
    %v257 = vpack.c.bf16 %v249, %v248
    %v258 = vpack.c.bf16 %v251, %v250
    %s259 = scalar_lea.vmem %s4, 64
    %v260 = vld [vmem:[%s259] sm:$0xff]
    %v261 = vld [vmem:[%s259 + $0x8] sm:$0xff]
    %v262 = vld [vmem:[%s259 + $0x10] sm:$0xff]
    %v263 = vld [vmem:[%s259 + $0x18] sm:$0xff]
    %265 = vset.pattern.permute.xlu0 0
    %266 = vperm.xlu0 %265, %v260
    %v267 = vpop.permute.xlu0 %266
    %270 = vset.pattern.permute.xlu0 0
    %271 = vperm.xlu0 %270, %v261
    %v272 = vpop.permute.xlu0 %271
    %275 = vset.pattern.permute.xlu0 0
    %276 = vperm.xlu0 %275, %v262
    %v277 = vpop.permute.xlu0 %276
    %280 = vset.pattern.permute.xlu0 0
    %281 = vperm.xlu0 %280, %v263
    %v282 = vpop.permute.xlu0 %281
    %v288 = vunpack.c.l.b16 %v253
    %v289 = vunpack.c.l.b16 %v254
    %v290 = vunpack.c.l.b16 %v255
    %v291 = vunpack.c.l.b16 %v256
    %v292 = vpack.c.b16 %v289, %v288
    %v293 = vpack.c.b16 %v291, %v290
    %v295 = vsel %vm143, %v292, 0
    %v298 = vsel %vm143, %v293, 0
    %300 = vmatpush.bf16.msra.mxu0 0
    %301 = vmatpush.bf16.msra.mxu0 0
    %302 = vmatpush.bf16.msra.mxu0 0
    %303 = vmatpush.bf16.msra.mxu0 0
    %304 = vmatpush.bf16.msra.mxu0 0
    %305 = vmatpush.bf16.msra.mxu0 0
    %306 = vmatpush.bf16.msra.mxu0 %v258
    %307 = vmatpush.bf16.msra.mxu0 %v257
    %308 = vmatmul.bf16.gmra.mxu0 %v295
    %v309 = vpop.f32.mrf.mxu0
    %v310 = vadd.f32 %v267, %v309
    %v311 = vpop.f32.mrf.mxu0
    %v312 = vadd.f32 %v272, %v311
    %313 = vmatmul.bf16.gmra.mxu0 %v298
    %v314 = vpop.f32.mrf.mxu0
    %v315 = vadd.f32 %v277, %v314
    %v316 = vpop.f32.mrf.mxu0
    %v317 = vadd.f32 %v282, %v316
    %318 = vdwg.mxu0
    %v319 = vmul.f32 %v310, 0.01
    %v320 = vmul.f32 %v312, 0.01
    %v321 = vmul.f32 %v315, 0.01
    %v322 = vmul.f32 %v317, 0.01
    %v323 = vmax.f32 %v310, %v319
    %v324 = vmax.f32 %v312, %v320
    %v325 = vmax.f32 %v315, %v321
    %v326 = vmax.f32 %v317, %v322
    %s327 = scalar_lea.vmem %s3, 48
    %v328 = vld [vmem:[%s327] sm:$0xf]
    %v329 = vld [vmem:[%s327 + $0x4] sm:$0xf]
    %v330 = vld [vmem:[%s327 + $0x8] sm:$0xf]
    %v331 = vld [vmem:[%s327 + $0xc] sm:$0xf]
    %v332 = vpack.c.bf16 %v324, %v323
    %v333 = vpack.c.bf16 %v326, %v325
    %s334 = scalar_lea.vmem %s4, 96
    %v335 = vld [vmem:[%s334] sm:$0xff]
    %v336 = vld [vmem:[%s334 + $0x8] sm:$0xff]
    %v337 = vld [vmem:[%s334 + $0x10] sm:$0xff]
    %v338 = vld [vmem:[%s334 + $0x18] sm:$0xff]
    %340 = vset.pattern.permute.xlu0 0
    %341 = vperm.xlu0 %340, %v335
    %v342 = vpop.permute.xlu0 %341
    %345 = vset.pattern.permute.xlu0 0
    %346 = vperm.xlu0 %345, %v336
    %v347 = vpop.permute.xlu0 %346
    %350 = vset.pattern.permute.xlu0 0
    %351 = vperm.xlu0 %350, %v337
    %v352 = vpop.permute.xlu0 %351
    %355 = vset.pattern.permute.xlu0 0
    %356 = vperm.xlu0 %355, %v338
    %v357 = vpop.permute.xlu0 %356
    %v363 = vunpack.c.l.b16 %v328
    %v364 = vunpack.c.l.b16 %v329
    %v365 = vunpack.c.l.b16 %v330
    %v366 = vunpack.c.l.b16 %v331
    %v367 = vpack.c.b16 %v364, %v363
    %v368 = vpack.c.b16 %v366, %v365
    %v370 = vsel %vm143, %v367, 0
    %v373 = vsel %vm143, %v368, 0
    %375 = vmatpush.bf16.msra.mxu0 0
    %376 = vmatpush.bf16.msra.mxu0 0
    %377 = vmatpush.bf16.msra.mxu0 0
    %378 = vmatpush.bf16.msra.mxu0 0
    %379 = vmatpush.bf16.msra.mxu0 0
    %380 = vmatpush.bf16.msra.mxu0 0
    %381 = vmatpush.bf16.msra.mxu0 %v333
    %382 = vmatpush.bf16.msra.mxu0 %v332
    %383 = vmatmul.bf16.gmra.mxu0 %v370
    %v384 = vpop.f32.mrf.mxu0
    %v385 = vadd.f32 %v342, %v384
    %v386 = vpop.f32.mrf.mxu0
    %v387 = vadd.f32 %v347, %v386
    %388 = vmatmul.bf16.gmra.mxu0 %v373
    %v389 = vpop.f32.mrf.mxu0
    %v390 = vadd.f32 %v352, %v389
    %v391 = vpop.f32.mrf.mxu0
    %v392 = vadd.f32 %v357, %v391
    %393 = vdwg.mxu0
    %v394 = vmul.f32 %v385, 0.01
    %v395 = vmul.f32 %v387, 0.01
    %v396 = vmul.f32 %v390, 0.01
    %v397 = vmul.f32 %v392, 0.01
    %v398 = vmax.f32 %v385, %v394
    %v399 = vmax.f32 %v387, %v395
    %v400 = vmax.f32 %v390, %v396
    %v401 = vmax.f32 %v392, %v397
    %s402 = scalar_lea.vmem %s3, 64
    %v403 = vld [vmem:[%s402] sm:$0xf]
    %v404 = vld [vmem:[%s402 + $0x4] sm:$0xf]
    %v405 = vld [vmem:[%s402 + $0x8] sm:$0xf]
    %v406 = vld [vmem:[%s402 + $0xc] sm:$0xf]
    %v407 = vpack.c.bf16 %v399, %v398
    %v408 = vpack.c.bf16 %v401, %v400
    %s409 = scalar_lea.vmem %s4, 128
    %v410 = vld [vmem:[%s409] sm:$0xff]
    %v411 = vld [vmem:[%s409 + $0x8] sm:$0xff]
    %v412 = vld [vmem:[%s409 + $0x10] sm:$0xff]
    %v413 = vld [vmem:[%s409 + $0x18] sm:$0xff]
    %415 = vset.pattern.permute.xlu0 0
    %416 = vperm.xlu0 %415, %v410
    %v417 = vpop.permute.xlu0 %416
    %420 = vset.pattern.permute.xlu0 0
    %421 = vperm.xlu0 %420, %v411
    %v422 = vpop.permute.xlu0 %421
    %425 = vset.pattern.permute.xlu0 0
    %426 = vperm.xlu0 %425, %v412
    %v427 = vpop.permute.xlu0 %426
    %430 = vset.pattern.permute.xlu0 0
    %431 = vperm.xlu0 %430, %v413
    %v432 = vpop.permute.xlu0 %431
    %v438 = vunpack.c.l.b16 %v403
    %v439 = vunpack.c.l.b16 %v404
    %v440 = vunpack.c.l.b16 %v405
    %v441 = vunpack.c.l.b16 %v406
    %v442 = vpack.c.b16 %v439, %v438
    %v443 = vpack.c.b16 %v441, %v440
    %v445 = vsel %vm143, %v442, 0
    %v448 = vsel %vm143, %v443, 0
    %450 = vmatpush.bf16.msra.mxu0 0
    %451 = vmatpush.bf16.msra.mxu0 0
    %452 = vmatpush.bf16.msra.mxu0 0
    %453 = vmatpush.bf16.msra.mxu0 0
    %454 = vmatpush.bf16.msra.mxu0 0
    %455 = vmatpush.bf16.msra.mxu0 0
    %456 = vmatpush.bf16.msra.mxu0 %v408
    %457 = vmatpush.bf16.msra.mxu0 %v407
    %458 = vmatmul.bf16.gmra.mxu0 %v445
    %v459 = vpop.f32.mrf.mxu0
    %v460 = vadd.f32 %v417, %v459
    %v461 = vpop.f32.mrf.mxu0
    %v462 = vadd.f32 %v422, %v461
    %463 = vmatmul.bf16.gmra.mxu0 %v448
    %v464 = vpop.f32.mrf.mxu0
    %v465 = vadd.f32 %v427, %v464
    %v466 = vpop.f32.mrf.mxu0
    %v467 = vadd.f32 %v432, %v466
    %468 = vdwg.mxu0
    %v469 = vmul.f32 %v460, 0.01
    %v470 = vmul.f32 %v462, 0.01
    %v471 = vmul.f32 %v465, 0.01
    %v472 = vmul.f32 %v467, 0.01
    %v473 = vmax.f32 %v460, %v469
    %v474 = vmax.f32 %v462, %v470
    %v475 = vmax.f32 %v465, %v471
    %v476 = vmax.f32 %v467, %v472
    %v477 = vld [vmem:[%s5] sm:$0xff]
    %v478 = vld [vmem:[%s5 + $0x8] sm:$0xff]
    %v479 = vld [vmem:[%s5 + $0x10] sm:$0xff]
    %v480 = vld [vmem:[%s5 + $0x18] sm:$0xff]
    %482 = vset.pattern.permute.xlu0 0
    %483 = vperm.xlu0 %482, %v477
    %v484 = vpop.permute.xlu0 %483
    %487 = vset.pattern.permute.xlu0 0
    %488 = vperm.xlu0 %487, %v478
    %v489 = vpop.permute.xlu0 %488
    %492 = vset.pattern.permute.xlu0 0
    %493 = vperm.xlu0 %492, %v479
    %v494 = vpop.permute.xlu0 %493
    %497 = vset.pattern.permute.xlu0 0
    %498 = vperm.xlu0 %497, %v480
    %v499 = vpop.permute.xlu0 %498
    %v501 = vmul.f32 %v473, %v484
    %v502 = vmul.f32 %v474, %v489
    %v503 = vmul.f32 %v475, %v494
    %v504 = vmul.f32 %v476, %v499
    %v505 = vsel %vm74, %v501, 0.0
    %v506 = vsel %vm74, %v502, 0.0
    %v507 = vadd.f32 %v505, %v506
    %v508 = vsel %vm74, %v503, 0.0
    %v509 = vadd.f32 %v507, %v508
    %v510 = vsel %vm74, %v504, 0.0
    %v511 = vadd.f32 %v509, %v510
    %v512 = vrot.slane %v511, 4
    %v513 = vadd.f32 %v511, %v512
    %v514 = vrot.slane %v513, 2
    %v515 = vadd.f32 %v513, %v514
    %v516 = vrot.slane %v515, 1
    %v517 = vadd.f32 %v515, %v516
    %s518 = sld [smem:[#allocation2]]
    %v519 = vstv %s518
    %v520 = vadd.f32 %v517, %v519
    %vm521 = vcmask 122880
    %522 = vst.msk [vmem:[#allocation3] sm:$0x1] %vm521, %v520
    // Predicated region
    $region30: #{tpu_custom_call.1} parent=1 // pred_check
      _
    $region31: #{tpu_custom_call.1} parent=1 // pred_check_branch
      %524 = sbr.rel (0) target = $region33
    $region32: #{tpu_custom_call.1} parent=1 // pred_region
      %526 = vsyncadd [#allocation4], 0
      %s528 = sshll.u32 [#allocation3], 4
      %s529 = int_to_ptr.vmem [resolvable:$true] %s528
      %s530 = sshll.u32 %s7, 4
      %s531 = int_to_ptr.hbm [resolvable:$true] %s530
      %533 = dma.vmem_to_hbm [thread:$0]  %s529, 16, %s531, [#allocation4]
    $region33: #{tpu_custom_call.1} parent=1 // pred_fallthru
      _
    // Predicated region
    $region34: #{tpu_custom_call.1} parent=1 // pred_check
      _
    $region35: #{tpu_custom_call.1} parent=1 // pred_check_branch
      %535 = sbr.rel (0) target = $region37
    $region36: #{tpu_custom_call.1} parent=1 // pred_region
      %537 = dma.done [#allocation4], 16
    $region37: #{tpu_custom_call.1} parent=1 // pred_fallthru
      _
    %538 = vsyncpa [#allocation4], 1

</llo_original>
